<compile_context>
chip_gen: v6e
topology: v6e:2x2x1
jax: 0.10.0
libtpu: 0.0.40
codegen_flags: <defaults>
</compile_context>

<pallas_src>
import jax
import jax.numpy as jnp
from jax.experimental import pallas as pl
from jax.experimental.pallas import tpu as pltpu


def _logreg_kernel(theta1_ref, theta0_ref, x_ref, o_ref):
    # theta refs live in SMEM: shape (1,) scalars.
    t1 = theta1_ref[0]
    t0 = theta0_ref[0]
    z = t1 * x_ref[...] + t0           # VPU elementwise mul-add
    o_ref[...] = jax.nn.sigmoid(z)     # exp/recip on EUP (free slot)


def _choose_tile(M, N, itemsize, tile_bytes):
    """Pick a lane-dense (tm, tn) block that fits the per-buffer byte budget."""
    total_bytes = M * N * itemsize
    if total_bytes <= tile_bytes:
        # Whole array in one grid step (block dims == full array dims is legal).
        return M, N
    row_bytes = N * itemsize
    if row_bytes <= tile_bytes:
        # Full-width rows (lane-dense output), as many rows as fit the budget.
        tm = (tile_bytes // row_bytes) // 8 * 8
        tm = max(8, min(tm, M))
        if M < 8:
            tm = M                     # full first dim also legal
        return tm, N
    # Very wide rows: tile the lane dim too, keeping it a multiple of 128.
    tm = min(M, 8)
    if N % 128 == 0:
        tn = (tile_bytes // (tm * itemsize)) // 128 * 128
        tn = max(128, min(tn, N))
        return tm, tn
    # Ragged, very wide N: keep full width and let the VMEM limit stretch.
    return tm, N


def logistic_regression_forward(x, theta1, theta0, *, tile_bytes=2 << 20):
    """y = sigmoid(theta1 * x + theta0), elementwise over any input shape.

    theta1, theta0: shape (1,) arrays (scalar parameters, as in the module).
    tile_bytes: per-buffer VMEM budget (~2 MiB default is safe on v5e/v6e/v7x).
    """
    orig_shape = x.shape
    if x.ndim == 2:
        x2 = x
    elif x.ndim == 0:
        x2 = x.reshape(1, 1)
    elif x.ndim == 1:
        x2 = x.reshape(1, x.shape[0])
    else:
        x2 = x.reshape(-1, x.shape[-1])
    M, N = x2.shape
    itemsize = jnp.dtype(x2.dtype).itemsize

    tm, tn = _choose_tile(M, N, itemsize, tile_bytes)
    grid = (pl.cdiv(M, tm), pl.cdiv(N, tn))

    # Double-buffered input tile + double-buffered output tile, plus headroom.
    tile_byte_count = tm * tn * itemsize
    vmem_limit = int(max(4 * tile_byte_count + (2 << 20), 16 << 20))

    y2 = pl.pallas_call(
        _logreg_kernel,
        out_shape=jax.ShapeDtypeStruct((M, N), x2.dtype),
        grid_spec=pltpu.PrefetchScalarGridSpec(
            num_scalar_prefetch=0,
            grid=grid,
            in_specs=[
                pl.BlockSpec(memory_space=pltpu.MemorySpace.SMEM),  # theta1 (1,)
                pl.BlockSpec(memory_space=pltpu.MemorySpace.SMEM),  # theta0 (1,)
                pl.BlockSpec((tm, tn), lambda i, j: (i, j)),
            ],
            out_specs=pl.BlockSpec((tm, tn), lambda i, j: (i, j)),
        ),
        compiler_params=pltpu.CompilerParams(
            dimension_semantics=("parallel", "parallel"),
            vmem_limit_bytes=vmem_limit,
        ),
    )(theta1, theta0, x2)

    return y2.reshape(orig_shape)


if __name__ == "__main__":
    key = jax.random.PRNGKey(0)
    kx1, kx2 = jax.random.split(key)

    # Parameters: module __init__ uses zeros of shape (1,). Use deterministic
    # nonzero values so the kernel output is non-trivial.
    theta1 = jnp.array([0.75], dtype=jnp.float32)
    theta0 = jnp.array([-0.25], dtype=jnp.float32)

    # Small input: exercises the single full-array block path (grid = (1, 1)).
    x_small = jax.random.normal(kx1, (16, 256), dtype=jnp.float32)
    y_small = jax.block_until_ready(
        logistic_regression_forward(x_small, theta1, theta0))
    ref_small = jax.nn.sigmoid(theta1[0] * x_small + theta0[0])
    assert y_small.shape == x_small.shape and y_small.dtype == x_small.dtype
    assert jnp.allclose(y_small, ref_small, atol=1e-6, rtol=1e-6)

    # Moderately larger, ragged input: exercises full-width row tiling with a
    # cdiv-masked last block (lane-dense output, large DMAs).
    x_big = jax.random.normal(kx2, (1000, 768), dtype=jnp.float32)
    y_big = jax.block_until_ready(
        logistic_regression_forward(x_big, theta1, theta0))
    ref_big = jax.nn.sigmoid(theta1[0] * x_big + theta0[0])
    assert y_big.shape == x_big.shape and y_big.dtype == x_big.dtype
    assert jnp.allclose(y_big, ref_big, atol=1e-6, rtol=1e-6)

    print("KERNEL_OK")
</pallas_src>

<mosaic_0001>
module attributes {stable_mosaic.version = 11 : i64} {
  func.func @_logreg_kernel(%arg0: i32, %arg1: i32, %arg2: memref<1xf32, #tpu.memory_space<smem>>, %arg3: memref<1xf32, #tpu.memory_space<smem>>, %arg4: memref<16x256xf32, #tpu.memory_space<vmem>>, %arg5: memref<16x256xf32, #tpu.memory_space<vmem>>) attributes {dimension_semantics = [#tpu.dimension_semantics<parallel>, #tpu.dimension_semantics<parallel>], iteration_bounds = array<i64: 1, 1>, scalar_prefetch = 0 : i64, scratch_operands = 0 : i64, tpu.core_type = #tpu.core_type<tc>, window_params = [{transform_indices = @transform_0, window_bounds = array<i64: 1>}, {transform_indices = @transform_1, window_bounds = array<i64: 1>}, {transform_indices = @transform_2, window_bounds = array<i64: 16, 256>}, {transform_indices = @transform_3, window_bounds = array<i64: 16, 256>}]} {
    %c0 = arith.constant 0 : index
    %0 = memref.load %arg2[%c0] : memref<1xf32, #tpu.memory_space<smem>>
    %c0_0 = arith.constant 0 : index
    %1 = memref.load %arg3[%c0_0] : memref<1xf32, #tpu.memory_space<smem>>
    %c0_1 = arith.constant 0 : index
    %c0_2 = arith.constant 0 : index
    %2 = vector.load %arg4[%c0_1, %c0_2] : memref<16x256xf32, #tpu.memory_space<vmem>>, vector<16x256xf32>
    %3 = vector.broadcast %0 : f32 to vector<16x256xf32>
    %4 = arith.mulf %3, %2 : vector<16x256xf32>
    %5 = vector.broadcast %1 : f32 to vector<16x256xf32>
    %6 = arith.addf %4, %5 : vector<16x256xf32>
    %7 = arith.negf %6 : vector<16x256xf32>
    %8 = math.exp %7 : vector<16x256xf32>
    %cst = arith.constant 1.000000e+00 : f32
    %9 = vector.broadcast %cst : f32 to vector<16x256xf32>
    %10 = arith.addf %9, %8 : vector<16x256xf32>
    %11 = arith.divf %9, %10 : vector<16x256xf32>
    %c0_3 = arith.constant 0 : index
    %c0_4 = arith.constant 0 : index
    %12 = vector.load %arg5[%c0_3, %c0_4] : memref<16x256xf32, #tpu.memory_space<vmem>>, vector<16x256xf32>
    tpu.vector_store %arg5[%c0_3, %c0_4], %11 {strides = array<i32>} : memref<16x256xf32, #tpu.memory_space<vmem>>, vector<16x256xf32>,
    return
  }
  func.func @transform_0(%arg0: i32, %arg1: i32) -> i32 {
    %c0_i32 = arith.constant 0 : i32
    %c0_i32_0 = arith.constant 0 : i32
    return %c0_i32 : i32
  }
  func.func @transform_1(%arg0: i32, %arg1: i32) -> i32 {
    %c0_i32 = arith.constant 0 : i32
    %c0_i32_0 = arith.constant 0 : i32
    return %c0_i32 : i32
  }
  func.func @transform_2(%arg0: i32, %arg1: i32) -> (i32, i32) {
    %c0_i32 = arith.constant 0 : i32
    return %arg0, %arg1 : i32, i32
  }
  func.func @transform_3(%arg0: i32, %arg1: i32) -> (i32, i32) {
    %c0_i32 = arith.constant 0 : i32
    return %arg0, %arg1 : i32, i32
  }
}

</mosaic_0001>

<llo_original>
// kernel: tpu_custom_call.1
$region0: #{tpu_custom_call.1}
  #allocation0 [shape = 'u32[]', space=smem, size = 0x4, offset = 0x4, fixed_abs, tag = 'smem constant byte address 0x4 - core index']
  #allocation1 [shape = 'u32[144,128]{1,0:T(1,128)}', space=vmem, size = 0x12000, scoped, tag = 'internal scratch']
  #allocation2 [shape = 'f32[1]{0:T(128)S(6)}', space=smem, size = 0x200, scoped, tag = 'scoped memory for tpu_custom_call.1']
  #allocation3 [shape = 'f32[1]{0:T(128)S(6)}', space=smem, size = 0x200, scoped, tag = 'scoped memory for tpu_custom_call.1']
  %s0 = inlined_call_operand.<no memory space> [shape: f32[1], index: 0, kind: input, shape index: {}]
  %s1 = inlined_call_operand.<no memory space> [shape: f32[1], index: 1, kind: input, shape index: {}]
  %s2 = inlined_call_operand.hbm [shape: f32[16,256], index: 2, kind: input, shape index: {}]
  %s3 = inlined_call_operand.hbm [shape: f32[16,256], index: 3, kind: output, shape index: {}]
  %s4 = sld [smem:[#allocation0]]
  $region26: #{tpu_custom_call.1} parent=0
    _
  %s6 = ssub.s32 1, %s4
  %s7 = scalar_select 0, %s6, %s4
  %8 = sst [smem:[#allocation2]] %s0
  %9 = sst [smem:[#allocation3]] %s1
  $region1: #{tpu_custom_call.1} parent=0
    #allocation4 [shape = 'u8[16384]{0}', space=vmem, size = 0x4000, scoped, tag = 'input window, operand 2, single buffered']
    #allocation5 [shape = 's32[1]{0}', space=sflag, size = 0x4, scoped, tag = 'scoped memory for tpu_custom_call.1']
    #allocation6 [shape = 's32[1]{0}', space=sflag, size = 0x4, scoped, tag = 'scoped memory for tpu_custom_call.1']
    #allocation7 [shape = 'u8[16384]{0}', space=vmem, size = 0x4000, scoped, tag = 'output window, operand 0, single buffered']
    %10 = vsyncpa [#allocation5], 0
    %11 = vsyncpa [#allocation6], 0
    // Predicated region
    $region2: #{tpu_custom_call.1} parent=1 // pred_check
      _
    $region3: #{tpu_custom_call.1} parent=1 // pred_check_branch
      %13 = sbr.rel (0) target = $region5
    $region4: #{tpu_custom_call.1} parent=1 // pred_region
      _
    $region5: #{tpu_custom_call.1} parent=1 // pred_fallthru
      _
    // Predicated region
    $region6: #{tpu_custom_call.1} parent=1 // pred_check
      _
    $region7: #{tpu_custom_call.1} parent=1 // pred_check_branch
      %15 = sbr.rel (0) target = $region9
    $region8: #{tpu_custom_call.1} parent=1 // pred_region
      _
    $region9: #{tpu_custom_call.1} parent=1 // pred_fallthru
      _
    // Predicated region
    $region10: #{tpu_custom_call.1} parent=1 // pred_check
      _
    $region11: #{tpu_custom_call.1} parent=1 // pred_check_branch
      %17 = sbr.rel (0) target = $region13
    $region12: #{tpu_custom_call.1} parent=1 // pred_region
      %s19 = ssub.s32 512, 512
      %20 = vsyncadd [#allocation5], %s19
      %s21 = sshll.u32 [#allocation4], 4
      %s22 = int_to_ptr.vmem [resolvable:$true] %s21
      %27 = dma.hbm_to_vmem [thread:$0]  %s2, 512, %s22, [#allocation5], 256, 256, 16
    $region13: #{tpu_custom_call.1} parent=1 // pred_fallthru
      _
    // Predicated region
    $region14: #{tpu_custom_call.1} parent=1 // pred_check
      _
    $region15: #{tpu_custom_call.1} parent=1 // pred_check_branch
      %29 = sbr.rel (0) target = $region17
    $region16: #{tpu_custom_call.1} parent=1 // pred_region
      %30 = dma.done [#allocation5], 512
    $region17: #{tpu_custom_call.1} parent=1 // pred_fallthru
      _
    %s31 = sld [smem:[#allocation2]]
    %s32 = sld [smem:[#allocation3]]
    %v33 = vld [vmem:[#allocation4] sm:$0xff]
    %v34 = vld [vmem:[#allocation4 + $0x8] sm:$0xff]
    %v35 = vld [vmem:[#allocation4 + $0x10] sm:$0xff]
    %v36 = vld [vmem:[#allocation4 + $0x18] sm:$0xff]
    %v37 = vstv %s31
    %v38 = vmul.f32 %v37, %v33
    %v39 = vmul.f32 %v37, %v34
    %v40 = vmul.f32 %v37, %v35
    %v41 = vmul.f32 %v37, %v36
    %v42 = vstv %s32
    %v43 = vadd.f32 %v38, %v42
    %v44 = vadd.f32 %v39, %v42
    %v45 = vadd.f32 %v40, %v42
    %v46 = vadd.f32 %v41, %v42
    %v47 = vxor.u32 %v43, 2147483648
    %v48 = vxor.u32 %v44, 2147483648
    %v49 = vxor.u32 %v45, 2147483648
    %v50 = vxor.u32 %v46, 2147483648
    %v51 = vmul.f32 %v47, 1.442695
    %v52 = vpow.pop %v51
    %v53 = vmul.f32 %v48, 1.442695
    %v54 = vpow.pop %v53
    %v55 = vmul.f32 %v49, 1.442695
    %v56 = vpow.pop %v55
    %v57 = vmul.f32 %v50, 1.442695
    %v58 = vpow.pop %v57
    %v59 = vadd.f32 %v52, 1.0
    %v60 = vadd.f32 %v54, 1.0
    %v61 = vadd.f32 %v56, 1.0
    %v62 = vadd.f32 %v58, 1.0
    %v63 = vrcp.pop %v59
    %v64 = vmul.f32 1.0, %v63
    %v65 = vrcp.pop %v60
    %v66 = vmul.f32 1.0, %v65
    %v67 = vrcp.pop %v61
    %v68 = vmul.f32 1.0, %v67
    %v69 = vrcp.pop %v62
    %v70 = vmul.f32 1.0, %v69
    %71 = vst [vmem:[#allocation7] sm:$0xff] %v64
    %72 = vst [vmem:[#allocation7 + $0x8] sm:$0xff] %v66
    %73 = vst [vmem:[#allocation7 + $0x10] sm:$0xff] %v68
    %74 = vst [vmem:[#allocation7 + $0x18] sm:$0xff] %v70
    // Predicated region
    $region18: #{tpu_custom_call.1} parent=1 // pred_check
      _
    $region19: #{tpu_custom_call.1} parent=1 // pred_check_branch
      %76 = sbr.rel (0) target = $region21
    $region20: #{tpu_custom_call.1} parent=1 // pred_region
      %s78 = ssub.s32 512, 512
      %79 = vsyncadd [#allocation6], %s78
      %s80 = sshll.u32 [#allocation7], 4
      %s81 = int_to_ptr.vmem [resolvable:$true] %s80
      %86 = dma.vmem_to_hbm [thread:$0]  %s81, 512, %s3, [#allocation6], 256, 256, 16
    $region21: #{tpu_custom_call.1} parent=1 // pred_fallthru
      _
    // Predicated region
    $region22: #{tpu_custom_call.1} parent=1 // pred_check
      _
    $region23: #{tpu_custom_call.1} parent=1 // pred_check_branch
      %88 = sbr.rel (0) target = $region25
    $region24: #{tpu_custom_call.1} parent=1 // pred_region
      %89 = dma.done [#allocation6], 512
    $region25: #{tpu_custom_call.1} parent=1 // pred_fallthru
      _
    %90 = vsyncpa [#allocation5], 1
    %91 = vsyncpa [#allocation6], 1

</llo_original>
